<compile_context>
chip_gen: v5e
topology: v5e:2x2
jax: 0.10.0
libtpu: 0.0.40
codegen_flags: <defaults>
</compile_context>

<pallas_src>
import math
import jax
import jax.numpy as jnp
from jax.experimental import pallas as pl
from jax.experimental.pallas import tpu as pltpu

NC_PAD = 128  # lane-dense padding for the 2-class classifier output


def discriminator_kernel(x_ref,
                         w1_ref, b1_ref,
                         w2_ref, b2_ref,
                         w3_ref, b3_ref,
                         wc_ref, bc_ref,
                         out_ref):
    """Fused MLP: 3x (Linear + ReLU) then classifier Linear.

    Inputs / weights are bf16 (peak MXU rate); accumulation, bias add and
    ReLU are f32.  All weights are grid-invariant and stay resident in VMEM.
    """
    x = x_ref[...]                                                     # bf16 [tile, d0]
    h = jnp.dot(x, w1_ref[...], preferred_element_type=jnp.float32) + b1_ref[...]
    h = jnp.maximum(h, 0.0).astype(jnp.bfloat16)
    h = jnp.dot(h, w2_ref[...], preferred_element_type=jnp.float32) + b2_ref[...]
    h = jnp.maximum(h, 0.0).astype(jnp.bfloat16)
    h = jnp.dot(h, w3_ref[...], preferred_element_type=jnp.float32) + b3_ref[...]
    h = jnp.maximum(h, 0.0).astype(jnp.bfloat16)
    logit = jnp.dot(h, wc_ref[...], preferred_element_type=jnp.float32) + bc_ref[...]
    out_ref[...] = logit.astype(out_ref.dtype)                         # [tile, NC_PAD]


def _round_up(a, m):
    return (a + m - 1) // m * m


def discriminator_forward(x, params, *, batch_tile=256):
    """x: [B, input_dim] float32. params: list of (W[in,out], b[1,out]) f32."""
    (w1, b1), (w2, b2), (w3, b3), (wc, bc) = params
    B, d0 = x.shape
    d1, d2, d3 = w1.shape[1], w2.shape[1], w3.shape[1]
    nc = wc.shape[1]

    # Pad the classifier to a lane-dense (128-wide) output slab.
    wc_p = jnp.zeros((d3, NC_PAD), jnp.float32).at[:, :nc].set(wc)
    bc_p = jnp.zeros((1, NC_PAD), jnp.float32).at[:, :nc].set(bc)

    # Choose the effective batch tile: cap at batch_tile, keep it a multiple
    # of 8, and prefer >=2 grid steps so the ("parallel",) batch axis can be
    # sharded across both TensorCores on v7x (no-op on v5e/v6e).
    tile = min(batch_tile, _round_up(B, 8))
    if B > 8 and _round_up(B, 8) // tile < 2:
        tile = max(8, _round_up(pl.cdiv(_round_up(B, 8), 2), 8))
    Bp = _round_up(B, tile)

    # bf16 inputs/weights for peak MXU rate; biases stay f32 (added post-acc).
    xb = x.astype(jnp.bfloat16)
    if Bp != B:
        xb = jnp.pad(xb, ((0, Bp - B), (0, 0)))
    w1b, w2b, w3b, wcb = (w.astype(jnp.bfloat16) for w in (w1, w2, w3, wc_p))
    b1f, b2f, b3f, bcf = (b.astype(jnp.float32) for b in (b1, b2, b3, bc_p))

    def full(shape):
        # Whole-array block, constant across the batch grid axis (stays in VMEM).
        return pl.BlockSpec(shape, lambda i: (0,) * len(shape))

    grid = (Bp // tile,)
    out = pl.pallas_call(
        discriminator_kernel,
        out_shape=jax.ShapeDtypeStruct((Bp, NC_PAD), jnp.float32),
        grid=grid,
        in_specs=[
            pl.BlockSpec((tile, d0), lambda i: (i, 0)),
            full((d0, d1)), full((1, d1)),
            full((d1, d2)), full((1, d2)),
            full((d2, d3)), full((1, d3)),
            full((d3, NC_PAD)), full((1, NC_PAD)),
        ],
        out_specs=pl.BlockSpec((tile, NC_PAD), lambda i: (i, 0)),
        compiler_params=pltpu.CompilerParams(
            dimension_semantics=("parallel",),
            vmem_limit_bytes=32 * 1024 * 1024,
        ),
    )(xb, w1b, b1f, w2b, b2f, w3b, b3f, wcb, bcf)

    return out[:B, :nc]


def init_linear(key, in_dim, out_dim):
    """PyTorch-style nn.Linear init (uniform +/- 1/sqrt(fan_in)).

    Weight stored transposed: shape [in_dim, out_dim]; bias [1, out_dim]."""
    kw, kb = jax.random.split(key)
    bound = 1.0 / math.sqrt(in_dim)
    w = jax.random.uniform(kw, (in_dim, out_dim), jnp.float32, -bound, bound)
    b = jax.random.uniform(kb, (1, out_dim), jnp.float32, -bound, bound)
    return w, b


def make_params(key, input_dim, hidden_dim, output_dim, num_classes=2):
    dim_list = [input_dim] + hidden_dim + [output_dim]
    keys = jax.random.split(key, len(dim_list))  # len-1 mlp layers + classifier
    params = []
    for i in range(len(dim_list) - 1):
        params.append(init_linear(keys[i], dim_list[i], dim_list[i + 1]))
    params.append(init_linear(keys[-1], output_dim, num_classes))
    return params


def reference_forward(x, params, *, bf16=False):
    """Pure-JAX reference. bf16=True emulates the kernel's input casts."""
    cast = (lambda a: a.astype(jnp.bfloat16)) if bf16 else (lambda a: a)
    h = x
    for (w, b) in params[:-1]:
        h = jnp.dot(cast(h), cast(w), preferred_element_type=jnp.float32) + b
        h = jnp.maximum(h, 0.0)
    wc, bc = params[-1]
    return jnp.dot(cast(h), cast(wc), preferred_element_type=jnp.float32) + bc


if __name__ == "__main__":
    # Discriminator(input_dim=256, hidden_dim=[128, 128], output_dim=64) -> 2 classes.
    # B=300 exercises the ragged-batch padding path and gives a 2-step grid.
    input_dim, hidden_dim, output_dim, num_classes = 256, [128, 128], 64, 2
    batch = 300

    key = jax.random.PRNGKey(0)
    kx, kp = jax.random.split(key)
    x = jax.random.normal(kx, (batch, input_dim), jnp.float32)
    params = make_params(kp, input_dim, hidden_dim, output_dim, num_classes)

    logit = discriminator_forward(x, params, batch_tile=256)
    logit = jax.block_until_ready(logit)
    assert logit.shape == (batch, num_classes)

    # Strict check vs. a reference that uses the same bf16-in / f32-acc numerics.
    ref_bf16 = reference_forward(x, params, bf16=True)
    assert jnp.allclose(logit, ref_bf16, atol=1e-3, rtol=1e-3), \
        "mismatch vs bf16-emulated reference"

    # Loose sanity check vs. the full-f32 reference (bf16 quantization error only).
    ref_f32 = reference_forward(x, params, bf16=False)
    assert jnp.allclose(logit, ref_f32, atol=5e-2, rtol=5e-2), \
        "mismatch vs f32 reference"

    print("KERNEL_OK")
</pallas_src>

<mosaic_0001>
module attributes {stable_mosaic.version = 11 : i64} {
  func.func @discriminator_kernel(%arg0: i32, %arg1: memref<152x256xbf16, #tpu.memory_space<vmem>>, %arg2: memref<256x128xbf16, #tpu.memory_space<vmem>>, %arg3: memref<1x128xf32, #tpu.memory_space<vmem>>, %arg4: memref<128x128xbf16, #tpu.memory_space<vmem>>, %arg5: memref<1x128xf32, #tpu.memory_space<vmem>>, %arg6: memref<128x64xbf16, #tpu.memory_space<vmem>>, %arg7: memref<1x64xf32, #tpu.memory_space<vmem>>, %arg8: memref<64x128xbf16, #tpu.memory_space<vmem>>, %arg9: memref<1x128xf32, #tpu.memory_space<vmem>>, %arg10: memref<152x128xf32, #tpu.memory_space<vmem>>) attributes {dimension_semantics = [#tpu.dimension_semantics<parallel>], iteration_bounds = array<i64: 2>, scalar_prefetch = 0 : i64, scratch_operands = 0 : i64, tpu.core_type = #tpu.core_type<tc>, window_params = [{transform_indices = @transform_0, window_bounds = array<i64: 152, 256>}, {pipeline_mode = #tpu.pipeline_mode<synchronous>, transform_indices = @transform_1, window_bounds = array<i64: 256, 128>}, {pipeline_mode = #tpu.pipeline_mode<synchronous>, transform_indices = @transform_2, window_bounds = array<i64: 1, 128>}, {pipeline_mode = #tpu.pipeline_mode<synchronous>, transform_indices = @transform_3, window_bounds = array<i64: 128, 128>}, {pipeline_mode = #tpu.pipeline_mode<synchronous>, transform_indices = @transform_4, window_bounds = array<i64: 1, 128>}, {pipeline_mode = #tpu.pipeline_mode<synchronous>, transform_indices = @transform_5, window_bounds = array<i64: 128, 64>}, {pipeline_mode = #tpu.pipeline_mode<synchronous>, transform_indices = @transform_6, window_bounds = array<i64: 1, 64>}, {pipeline_mode = #tpu.pipeline_mode<synchronous>, transform_indices = @transform_7, window_bounds = array<i64: 64, 128>}, {pipeline_mode = #tpu.pipeline_mode<synchronous>, transform_indices = @transform_8, window_bounds = array<i64: 1, 128>}, {transform_indices = @transform_9, window_bounds = array<i64: 152, 128>}]} {
    %c0 = arith.constant 0 : index
    %c0_0 = arith.constant 0 : index
    %0 = vector.load %arg1[%c0, %c0_0] : memref<152x256xbf16, #tpu.memory_space<vmem>>, vector<152x256xbf16>
    %c0_1 = arith.constant 0 : index
    %c0_2 = arith.constant 0 : index
    %1 = vector.load %arg2[%c0_1, %c0_2] : memref<256x128xbf16, #tpu.memory_space<vmem>>, vector<256x128xbf16>
    %cst = arith.constant dense<0.000000e+00> : vector<152x128xf32>
    %2 = tpu.matmul %0, %1, %cst {dimension_numbers = #tpu.dot_dimension_numbers<[1], [0], [0], [1], [0, 0, 1, 1], [], []>} : vector<152x256xbf16>, vector<256x128xbf16>, vector<152x128xf32> -> vector<152x128xf32>
    %c0_3 = arith.constant 0 : index
    %c0_4 = arith.constant 0 : index
    %3 = vector.load %arg3[%c0_3, %c0_4] : memref<1x128xf32, #tpu.memory_space<vmem>>, vector<1x128xf32>
    %4 = vector.broadcast %3 : vector<1x128xf32> to vector<152x128xf32>
    %5 = arith.addf %2, %4 : vector<152x128xf32>
    %cst_5 = arith.constant 0.000000e+00 : f32
    %6 = vector.broadcast %cst_5 : f32 to vector<152x128xf32>
    %7 = arith.maximumf %5, %6 : vector<152x128xf32>
    %8 = arith.truncf %7 : vector<152x128xf32> to vector<152x128xbf16>
    %c0_6 = arith.constant 0 : index
    %c0_7 = arith.constant 0 : index
    %9 = vector.load %arg4[%c0_6, %c0_7] : memref<128x128xbf16, #tpu.memory_space<vmem>>, vector<128x128xbf16>
    %cst_8 = arith.constant dense<0.000000e+00> : vector<152x128xf32>
    %10 = tpu.matmul %8, %9, %cst_8 {dimension_numbers = #tpu.dot_dimension_numbers<[1], [0], [0], [1], [0, 0, 1, 1], [], []>} : vector<152x128xbf16>, vector<128x128xbf16>, vector<152x128xf32> -> vector<152x128xf32>
    %c0_9 = arith.constant 0 : index
    %c0_10 = arith.constant 0 : index
    %11 = vector.load %arg5[%c0_9, %c0_10] : memref<1x128xf32, #tpu.memory_space<vmem>>, vector<1x128xf32>
    %12 = vector.broadcast %11 : vector<1x128xf32> to vector<152x128xf32>
    %13 = arith.addf %10, %12 : vector<152x128xf32>
    %cst_11 = arith.constant 0.000000e+00 : f32
    %14 = vector.broadcast %cst_11 : f32 to vector<152x128xf32>
    %15 = arith.maximumf %13, %14 : vector<152x128xf32>
    %16 = arith.truncf %15 : vector<152x128xf32> to vector<152x128xbf16>
    %c0_12 = arith.constant 0 : index
    %c0_13 = arith.constant 0 : index
    %17 = vector.load %arg6[%c0_12, %c0_13] : memref<128x64xbf16, #tpu.memory_space<vmem>>, vector<128x64xbf16>
    %cst_14 = arith.constant dense<0.000000e+00> : vector<152x64xf32>
    %18 = tpu.matmul %16, %17, %cst_14 {dimension_numbers = #tpu.dot_dimension_numbers<[1], [0], [0], [1], [0, 0, 1, 1], [], []>} : vector<152x128xbf16>, vector<128x64xbf16>, vector<152x64xf32> -> vector<152x64xf32>
    %c0_15 = arith.constant 0 : index
    %c0_16 = arith.constant 0 : index
    %19 = vector.load %arg7[%c0_15, %c0_16] : memref<1x64xf32, #tpu.memory_space<vmem>>, vector<1x64xf32>
    %20 = vector.broadcast %19 : vector<1x64xf32> to vector<152x64xf32>
    %21 = arith.addf %18, %20 : vector<152x64xf32>
    %cst_17 = arith.constant 0.000000e+00 : f32
    %22 = vector.broadcast %cst_17 : f32 to vector<152x64xf32>
    %23 = arith.maximumf %21, %22 : vector<152x64xf32>
    %24 = arith.truncf %23 : vector<152x64xf32> to vector<152x64xbf16>
    %c0_18 = arith.constant 0 : index
    %c0_19 = arith.constant 0 : index
    %25 = vector.load %arg8[%c0_18, %c0_19] : memref<64x128xbf16, #tpu.memory_space<vmem>>, vector<64x128xbf16>
    %cst_20 = arith.constant dense<0.000000e+00> : vector<152x128xf32>
    %26 = tpu.matmul %24, %25, %cst_20 {dimension_numbers = #tpu.dot_dimension_numbers<[1], [0], [0], [1], [0, 0, 1, 1], [], []>} : vector<152x64xbf16>, vector<64x128xbf16>, vector<152x128xf32> -> vector<152x128xf32>
    %c0_21 = arith.constant 0 : index
    %c0_22 = arith.constant 0 : index
    %27 = vector.load %arg9[%c0_21, %c0_22] : memref<1x128xf32, #tpu.memory_space<vmem>>, vector<1x128xf32>
    %28 = vector.broadcast %27 : vector<1x128xf32> to vector<152x128xf32>
    %29 = arith.addf %26, %28 : vector<152x128xf32>
    %c0_23 = arith.constant 0 : index
    %c0_24 = arith.constant 0 : index
    %30 = vector.load %arg10[%c0_23, %c0_24] : memref<152x128xf32, #tpu.memory_space<vmem>>, vector<152x128xf32>
    tpu.vector_store %arg10[%c0_23, %c0_24], %29 {strides = array<i32>} : memref<152x128xf32, #tpu.memory_space<vmem>>, vector<152x128xf32>,
    return
  }
  func.func @transform_0(%arg0: i32) -> (i32, i32) {
    %c0_i32 = arith.constant 0 : i32
    %c0_i32_0 = arith.constant 0 : i32
    return %arg0, %c0_i32 : i32, i32
  }
  func.func @transform_1(%arg0: i32) -> (i32, i32) {
    %c0_i32 = arith.constant 0 : i32
    %c0_i32_0 = arith.constant 0 : i32
    %c0_i32_1 = arith.constant 0 : i32
    return %c0_i32, %c0_i32_0 : i32, i32
  }
  func.func @transform_2(%arg0: i32) -> (i32, i32) {
    %c0_i32 = arith.constant 0 : i32
    %c0_i32_0 = arith.constant 0 : i32
    %c0_i32_1 = arith.constant 0 : i32
    return %c0_i32, %c0_i32_0 : i32, i32
  }
  func.func @transform_3(%arg0: i32) -> (i32, i32) {
    %c0_i32 = arith.constant 0 : i32
    %c0_i32_0 = arith.constant 0 : i32
    %c0_i32_1 = arith.constant 0 : i32
    return %c0_i32, %c0_i32_0 : i32, i32
  }
  func.func @transform_4(%arg0: i32) -> (i32, i32) {
    %c0_i32 = arith.constant 0 : i32
    %c0_i32_0 = arith.constant 0 : i32
    %c0_i32_1 = arith.constant 0 : i32
    return %c0_i32, %c0_i32_0 : i32, i32
  }
  func.func @transform_5(%arg0: i32) -> (i32, i32) {
    %c0_i32 = arith.constant 0 : i32
    %c0_i32_0 = arith.constant 0 : i32
    %c0_i32_1 = arith.constant 0 : i32
    return %c0_i32, %c0_i32_0 : i32, i32
  }
  func.func @transform_6(%arg0: i32) -> (i32, i32) {
    %c0_i32 = arith.constant 0 : i32
    %c0_i32_0 = arith.constant 0 : i32
    %c0_i32_1 = arith.constant 0 : i32
    return %c0_i32, %c0_i32_0 : i32, i32
  }
  func.func @transform_7(%arg0: i32) -> (i32, i32) {
    %c0_i32 = arith.constant 0 : i32
    %c0_i32_0 = arith.constant 0 : i32
    %c0_i32_1 = arith.constant 0 : i32
    return %c0_i32, %c0_i32_0 : i32, i32
  }
  func.func @transform_8(%arg0: i32) -> (i32, i32) {
    %c0_i32 = arith.constant 0 : i32
    %c0_i32_0 = arith.constant 0 : i32
    %c0_i32_1 = arith.constant 0 : i32
    return %c0_i32, %c0_i32_0 : i32, i32
  }
  func.func @transform_9(%arg0: i32) -> (i32, i32) {
    %c0_i32 = arith.constant 0 : i32
    %c0_i32_0 = arith.constant 0 : i32
    return %arg0, %c0_i32 : i32, i32
  }
}

</mosaic_0001>

<llo_original>
// kernel: tpu_custom_call.1
$region0: #{tpu_custom_call.1}
  #allocation0 [shape = 'u32[]', space=smem, size = 0x4, offset = 0x4, fixed_abs, tag = 'smem constant byte address 0x4 - core index']
  #allocation1 [shape = 'u32[72,128]{1,0:T(1,128)}', space=vmem, size = 0x9000, scoped, tag = 'internal scratch']
  %s0 = inlined_call_operand.hbm [shape: bf16[304,256], index: 0, kind: input, shape index: {}]
  %s1 = inlined_call_operand.hbm [shape: bf16[256,128], index: 1, kind: input, shape index: {}]
  %s2 = inlined_call_operand.vmem [shape: f32[1,128], index: 2, kind: input, shape index: {}]
  %s3 = inlined_call_operand.vmem [shape: bf16[128,128], index: 3, kind: input, shape index: {}]
  %s4 = inlined_call_operand.vmem [shape: f32[1,128], index: 4, kind: input, shape index: {}]
  %s5 = inlined_call_operand.vmem [shape: bf16[128,64], index: 5, kind: input, shape index: {}]
  %s6 = inlined_call_operand.vmem [shape: f32[1,64], index: 6, kind: input, shape index: {}]
  %s7 = inlined_call_operand.vmem [shape: bf16[64,128], index: 7, kind: input, shape index: {}]
  %s8 = inlined_call_operand.vmem [shape: f32[1,128], index: 8, kind: input, shape index: {}]
  %s9 = inlined_call_operand.hbm [shape: f32[304,128], index: 9, kind: output, shape index: {}]
  %s10 = sld [smem:[#allocation0]]
  $region77: #{tpu_custom_call.1} parent=0
    _
  %s12 = ssub.s32 1, %s10
  %s13 = scalar_select 0, %s12, %s10
  $region1: #{tpu_custom_call.1} parent=0
    #allocation2 [shape = 'u8[155648]{0}', space=vmem, size = 0x26000, scoped, tag = 'input window, operand 0']
    #allocation3 [shape = 's32[2]{0}', space=sflag, size = 0x8, scoped, tag = 'scoped memory for tpu_custom_call.1']
    #allocation4 [shape = 's32[2]{0}', space=sflag, size = 0x8, scoped, tag = 'scoped memory for tpu_custom_call.1']
    #allocation5 [shape = 'u8[65536]{0}', space=vmem, size = 0x10000, scoped, tag = 'input window, operand 1, single buffered']
    #allocation6 [shape = 's32[1]{0}', space=sflag, size = 0x4, scoped, tag = 'scoped memory for tpu_custom_call.1']
    #allocation7 [shape = 'u8[155648]{0}', space=vmem, size = 0x26000, scoped, tag = 'output window, operand 0']
    %14 = vsyncpa [#allocation3], 0
    %s15 = scalar_lea.sflag [#allocation3], 1
    %16 = vsyncpa %s15, 0
    %17 = vsyncpa [#allocation6], 0
    %18 = vsyncpa [#allocation4], 0
    %s19 = scalar_lea.sflag [#allocation4], 1
    %20 = vsyncpa %s19, 0
    loop: start=0, step=1, limit=4
    $region2: #{tpu_custom_call.1} parent=1 // loop_pre_header
      _
    $region3: #{tpu_custom_call.1} parent=1 // loop_header
      %s22 = sphi 0, %s26
      %p23 = scmp.ge.s32.totalorder %s22, 4
      %s32 = sphi 0, %s34
      %s35 = sphi 0, %s32
      %s36 = sphi 0, %s35
      %s52 = sphi 0, %s36
      %s56 = sphi 0, %s56
      %s58 = sphi 0, %s56
      %s59 = sphi 0, %s58
      %s73 = sphi 0, %s59
      %s77 = sphi 0, %s77
      %s79 = sphi 0, %s77
      %s80 = sphi 0, %s79
      %s94 = sphi 0, %s80
      %s98 = sphi 0, %s98
      %s100 = sphi 0, %s98
      %s101 = sphi 0, %s100
      %s115 = sphi 0, %s101
      %s119 = sphi 0, %s119
      %s121 = sphi 0, %s119
      %s122 = sphi 0, %s121
      %s136 = sphi 0, %s122
      %s140 = sphi 0, %s140
      %s142 = sphi 0, %s140
      %s143 = sphi 0, %s142
      %s157 = sphi 0, %s143
      %s161 = sphi 0, %s161
      %s163 = sphi 0, %s161
      %s164 = sphi 0, %s163
      %s178 = sphi 0, %s164
      %s182 = sphi 0, %s182
      %s184 = sphi 0, %s182
      %s185 = sphi 0, %s184
      %s199 = sphi 0, %s185
      %s203 = sphi 0, %s203
      %s205 = sphi 0, %s203
      %s206 = sphi 0, %s205
      %s220 = sphi 0, %s206
      %s226 = sphi 0, %s228
      %s229 = sphi 0, %s226
      %s230 = sphi 0, %s229
      %s246 = sphi 0, %s230
    $region4: #{tpu_custom_call.1} parent=1 // loop_header_branch
      %25 = sbr.rel (%p23) target = $region8
    $region5: #{tpu_custom_call.1} parent=1 // loop_body
      %s27 = ssub.s32 %s22, 1
      %s28 = ssub.s32 %s22, 2
      %s29 = sadd.s32 %s22, 1
      %s30 = ssub.s32 %s22, %s29
      %p31 = scmp.eq.s32.totalorder %s30, 0
      %s33 = sadd.s32 %s32, 1
      %s34 = scalar_select %p31, %s32, %s33
      %p37 = pneg %p31
      %p38 = scmp.eq.s32.totalorder %s22, 1
      %p39 = por %p37, %p38
      %p40 = scmp.ne.s32.totalorder %s32, %s35
      %p41 = scmp.eq.s32.totalorder %s22, 0
      %p42 = por %p40, %p41
      %p43 = scmp.ne.s32.totalorder %s32, %s35
      %p44 = scmp.eq.s32.totalorder %s27, 1
      %p45 = por %p43, %p44
      %p46 = scmp.ne.s32.totalorder %s35, %s36
      %p47 = scmp.eq.s32.totalorder %s27, 0
      %p48 = por %p46, %p47
      %p49 = scmp.ne.s32.totalorder %s35, %s36
      %p50 = scmp.eq.s32.totalorder %s28, 1
      %p51 = por %p49, %p50
      %p53 = scmp.ne.s32.totalorder %s36, %s52
      %p54 = scmp.eq.s32.totalorder %s28, 0
      %p55 = por %p53, %p54
      %s57 = sadd.s32 %s56, 1
      %p60 = scmp.eq.s32.totalorder %s22, 1
      %p61 = scmp.ne.s32.totalorder %s56, %s58
      %p62 = scmp.eq.s32.totalorder %s22, 0
      %p63 = por %p61, %p62
      %p64 = scmp.ne.s32.totalorder %s56, %s58
      %p65 = scmp.eq.s32.totalorder %s27, 1
      %p66 = por %p64, %p65
      %p67 = scmp.ne.s32.totalorder %s58, %s59
      %p68 = scmp.eq.s32.totalorder %s27, 0
      %p69 = por %p67, %p68
      %p70 = scmp.ne.s32.totalorder %s58, %s59
      %p71 = scmp.eq.s32.totalorder %s28, 1
      %p72 = por %p70, %p71
      %p74 = scmp.ne.s32.totalorder %s59, %s73
      %p75 = scmp.eq.s32.totalorder %s28, 0
      %p76 = por %p74, %p75
      %s78 = sadd.s32 %s77, 1
      %p81 = scmp.eq.s32.totalorder %s22, 1
      %p82 = scmp.ne.s32.totalorder %s77, %s79
      %p83 = scmp.eq.s32.totalorder %s22, 0
      %p84 = por %p82, %p83
      %p85 = scmp.ne.s32.totalorder %s77, %s79
      %p86 = scmp.eq.s32.totalorder %s27, 1
      %p87 = por %p85, %p86
      %p88 = scmp.ne.s32.totalorder %s79, %s80
      %p89 = scmp.eq.s32.totalorder %s27, 0
      %p90 = por %p88, %p89
      %p91 = scmp.ne.s32.totalorder %s79, %s80
      %p92 = scmp.eq.s32.totalorder %s28, 1
      %p93 = por %p91, %p92
      %p95 = scmp.ne.s32.totalorder %s80, %s94
      %p96 = scmp.eq.s32.totalorder %s28, 0
      %p97 = por %p95, %p96
      %s99 = sadd.s32 %s98, 1
      %p102 = scmp.eq.s32.totalorder %s22, 1
      %p103 = scmp.ne.s32.totalorder %s98, %s100
      %p104 = scmp.eq.s32.totalorder %s22, 0
      %p105 = por %p103, %p104
      %p106 = scmp.ne.s32.totalorder %s98, %s100
      %p107 = scmp.eq.s32.totalorder %s27, 1
      %p108 = por %p106, %p107
      %p109 = scmp.ne.s32.totalorder %s100, %s101
      %p110 = scmp.eq.s32.totalorder %s27, 0
      %p111 = por %p109, %p110
      %p112 = scmp.ne.s32.totalorder %s100, %s101
      %p113 = scmp.eq.s32.totalorder %s28, 1
      %p114 = por %p112, %p113
      %p116 = scmp.ne.s32.totalorder %s101, %s115
      %p117 = scmp.eq.s32.totalorder %s28, 0
      %p118 = por %p116, %p117
      %s120 = sadd.s32 %s119, 1
      %p123 = scmp.eq.s32.totalorder %s22, 1
      %p124 = scmp.ne.s32.totalorder %s119, %s121
      %p125 = scmp.eq.s32.totalorder %s22, 0
      %p126 = por %p124, %p125
      %p127 = scmp.ne.s32.totalorder %s119, %s121
      %p128 = scmp.eq.s32.totalorder %s27, 1
      %p129 = por %p127, %p128
      %p130 = scmp.ne.s32.totalorder %s121, %s122
      %p131 = scmp.eq.s32.totalorder %s27, 0
      %p132 = por %p130, %p131
      %p133 = scmp.ne.s32.totalorder %s121, %s122
      %p134 = scmp.eq.s32.totalorder %s28, 1
      %p135 = por %p133, %p134
      %p137 = scmp.ne.s32.totalorder %s122, %s136
      %p138 = scmp.eq.s32.totalorder %s28, 0
      %p139 = por %p137, %p138
      %s141 = sadd.s32 %s140, 1
      %p144 = scmp.eq.s32.totalorder %s22, 1
      %p145 = scmp.ne.s32.totalorder %s140, %s142
      %p146 = scmp.eq.s32.totalorder %s22, 0
      %p147 = por %p145, %p146
      %p148 = scmp.ne.s32.totalorder %s140, %s142
      %p149 = scmp.eq.s32.totalorder %s27, 1
      %p150 = por %p148, %p149
      %p151 = scmp.ne.s32.totalorder %s142, %s143
      %p152 = scmp.eq.s32.totalorder %s27, 0
      %p153 = por %p151, %p152
      %p154 = scmp.ne.s32.totalorder %s142, %s143
      %p155 = scmp.eq.s32.totalorder %s28, 1
      %p156 = por %p154, %p155
      %p158 = scmp.ne.s32.totalorder %s143, %s157
      %p159 = scmp.eq.s32.totalorder %s28, 0
      %p160 = por %p158, %p159
      %s162 = sadd.s32 %s161, 1
      %p165 = scmp.eq.s32.totalorder %s22, 1
      %p166 = scmp.ne.s32.totalorder %s161, %s163
      %p167 = scmp.eq.s32.totalorder %s22, 0
      %p168 = por %p166, %p167
      %p169 = scmp.ne.s32.totalorder %s161, %s163
      %p170 = scmp.eq.s32.totalorder %s27, 1
      %p171 = por %p169, %p170
      %p172 = scmp.ne.s32.totalorder %s163, %s164
      %p173 = scmp.eq.s32.totalorder %s27, 0
      %p174 = por %p172, %p173
      %p175 = scmp.ne.s32.totalorder %s163, %s164
      %p176 = scmp.eq.s32.totalorder %s28, 1
      %p177 = por %p175, %p176
      %p179 = scmp.ne.s32.totalorder %s164, %s178
      %p180 = scmp.eq.s32.totalorder %s28, 0
      %p181 = por %p179, %p180
      %s183 = sadd.s32 %s182, 1
      %p186 = scmp.eq.s32.totalorder %s22, 1
      %p187 = scmp.ne.s32.totalorder %s182, %s184
      %p188 = scmp.eq.s32.totalorder %s22, 0
      %p189 = por %p187, %p188
      %p190 = scmp.ne.s32.totalorder %s182, %s184
      %p191 = scmp.eq.s32.totalorder %s27, 1
      %p192 = por %p190, %p191
      %p193 = scmp.ne.s32.totalorder %s184, %s185
      %p194 = scmp.eq.s32.totalorder %s27, 0
      %p195 = por %p193, %p194
      %p196 = scmp.ne.s32.totalorder %s184, %s185
      %p197 = scmp.eq.s32.totalorder %s28, 1
      %p198 = por %p196, %p197
      %p200 = scmp.ne.s32.totalorder %s185, %s199
      %p201 = scmp.eq.s32.totalorder %s28, 0
      %p202 = por %p200, %p201
      %s204 = sadd.s32 %s203, 1
      %p207 = scmp.eq.s32.totalorder %s22, 1
      %p208 = scmp.ne.s32.totalorder %s203, %s205
      %p209 = scmp.eq.s32.totalorder %s22, 0
      %p210 = por %p208, %p209
      %p211 = scmp.ne.s32.totalorder %s203, %s205
      %p212 = scmp.eq.s32.totalorder %s27, 1
      %p213 = por %p211, %p212
      %p214 = scmp.ne.s32.totalorder %s205, %s206
      %p215 = scmp.eq.s32.totalorder %s27, 0
      %p216 = por %p214, %p215
      %p217 = scmp.ne.s32.totalorder %s205, %s206
      %p218 = scmp.eq.s32.totalorder %s28, 1
      %p219 = por %p217, %p218
      %p221 = scmp.ne.s32.totalorder %s206, %s220
      %p222 = scmp.eq.s32.totalorder %s28, 0
      %p223 = por %p221, %p222
      %s224 = ssub.s32 %s22, %s29
      %p225 = scmp.eq.s32.totalorder %s224, 0
      %s227 = sadd.s32 %s226, 1
      %s228 = scalar_select %p225, %s226, %s227
      %p231 = pneg %p225
      %p232 = scmp.eq.s32.totalorder %s22, 1
      %p233 = por %p231, %p232
      %p234 = scmp.ne.s32.totalorder %s226, %s229
      %p235 = scmp.eq.s32.totalorder %s22, 0
      %p236 = por %p234, %p235
      %p237 = scmp.ne.s32.totalorder %s226, %s229
      %p238 = scmp.eq.s32.totalorder %s27, 1
      %p239 = por %p237, %p238
      %p240 = scmp.ne.s32.totalorder %s229, %s230
      %p241 = scmp.eq.s32.totalorder %s27, 0
      %p242 = por %p240, %p241
      %p243 = scmp.ne.s32.totalorder %s229, %s230
      %p244 = scmp.eq.s32.totalorder %s28, 1
      %p245 = por %p243, %p244
      %p247 = scmp.ne.s32.totalorder %s230, %s246
      %p248 = scmp.eq.s32.totalorder %s28, 0
      %p249 = por %p247, %p248
      %p250 = scmp.le.s32.totalorder 1, %s22
      %p251 = scmp.lt.s32.totalorder %s22, 3
      %p252 = pnand %p250, %p251
      %p253 = pneg %p252
      // Predicated region
      $region9: #{tpu_custom_call.1} parent=5 // pred_check
        _
      $region10: #{tpu_custom_call.1} parent=5 // pred_check_branch
        %255 = sbr.rel (%p252) target = $region12
      $region11: #{tpu_custom_call.1} parent=5 // pred_region
        %s256 = ssub.s32 %s22, 1
        // Predicated region
        $region13: #{tpu_custom_call.1} parent=11 // pred_check
          %p257 = pneg %p69
        $region14: #{tpu_custom_call.1} parent=11 // pred_check_branch
          %259 = sbr.rel (%p257) target = $region16
        $region15: #{tpu_custom_call.1} parent=11 // pred_region
          %261 = vsyncadd [#allocation6], 0
          %s262 = sshll.u32 %s1, 4
          %s263 = int_to_ptr.hbm [resolvable:$true] %s262
          %s264 = sshll.u32 [#allocation5], 4
          %s265 = int_to_ptr.vmem [resolvable:$true] %s264
          %270 = dma.hbm_to_vmem [thread:$0]  %s263, 2048, %s265, [#allocation6], 64, 64, 4
        $region16: #{tpu_custom_call.1} parent=11 // pred_fallthru
          _
        // Predicated region
        $region17: #{tpu_custom_call.1} parent=11 // pred_check
          %p271 = pneg %p90
        $region18: #{tpu_custom_call.1} parent=11 // pred_check_branch
          %273 = sbr.rel (%p271) target = $region20
        $region19: #{tpu_custom_call.1} parent=11 // pred_region
          _
        $region20: #{tpu_custom_call.1} parent=11 // pred_fallthru
          _
        // Predicated region
        $region21: #{tpu_custom_call.1} parent=11 // pred_check
          %p274 = pneg %p111
        $region22: #{tpu_custom_call.1} parent=11 // pred_check_branch
          %276 = sbr.rel (%p274) target = $region24
        $region23: #{tpu_custom_call.1} parent=11 // pred_region
          _
        $region24: #{tpu_custom_call.1} parent=11 // pred_fallthru
          _
        // Predicated region
        $region25: #{tpu_custom_call.1} parent=11 // pred_check
          %p277 = pneg %p132
        $region26: #{tpu_custom_call.1} parent=11 // pred_check_branch
          %279 = sbr.rel (%p277) target = $region28
        $region27: #{tpu_custom_call.1} parent=11 // pred_region
          _
        $region28: #{tpu_custom_call.1} parent=11 // pred_fallthru
          _
        // Predicated region
        $region29: #{tpu_custom_call.1} parent=11 // pred_check
          %p280 = pneg %p153
        $region30: #{tpu_custom_call.1} parent=11 // pred_check_branch
          %282 = sbr.rel (%p280) target = $region32
        $region31: #{tpu_custom_call.1} parent=11 // pred_region
          _
        $region32: #{tpu_custom_call.1} parent=11 // pred_fallthru
          _
        // Predicated region
        $region33: #{tpu_custom_call.1} parent=11 // pred_check
          %p283 = pneg %p174
        $region34: #{tpu_custom_call.1} parent=11 // pred_check_branch
          %285 = sbr.rel (%p283) target = $region36
        $region35: #{tpu_custom_call.1} parent=11 // pred_region
          _
        $region36: #{tpu_custom_call.1} parent=11 // pred_fallthru
          _
        // Predicated region
        $region37: #{tpu_custom_call.1} parent=11 // pred_check
          %p286 = pneg %p195
        $region38: #{tpu_custom_call.1} parent=11 // pred_check_branch
          %288 = sbr.rel (%p286) target = $region40
        $region39: #{tpu_custom_call.1} parent=11 // pred_region
          _
        $region40: #{tpu_custom_call.1} parent=11 // pred_fallthru
          _
        // Predicated region
        $region41: #{tpu_custom_call.1} parent=11 // pred_check
          %p289 = pneg %p216
        $region42: #{tpu_custom_call.1} parent=11 // pred_check_branch
          %291 = sbr.rel (%p289) target = $region44
        $region43: #{tpu_custom_call.1} parent=11 // pred_region
          _
        $region44: #{tpu_custom_call.1} parent=11 // pred_fallthru
          _
      $region12: #{tpu_custom_call.1} parent=5 // pred_fallthru
        _
      %p292 = scmp.lt.s32.totalorder %s22, 2
      // Predicated region
      $region45: #{tpu_custom_call.1} parent=5 // pred_check
        %p293 = pneg %p292
      $region46: #{tpu_custom_call.1} parent=5 // pred_check_branch
        %295 = sbr.rel (%p293) target = $region48
      $region47: #{tpu_custom_call.1} parent=5 // pred_region
        // Predicated region
        $region49: #{tpu_custom_call.1} parent=47 // pred_check
          %p296 = pneg %p42
        $region50: #{tpu_custom_call.1} parent=47 // pred_check_branch
          %298 = sbr.rel (%p296) target = $region52
        $region51: #{tpu_custom_call.1} parent=47 // pred_region
          %s299 = sand.u32 %s32, 1
          %s300 = scalar_lea.sflag [#allocation3], %s299
          %s301 = sand.u32 %s32, 1
          %s302 = smul.addr %s301, 152
          %s303 = scalar_lea.vmem [#allocation2], %s302
          %s304 = smul.u32 19, %s22
          %306 = vsyncadd %s300, 0
          %s307 = smul.addr %s304, 2
          %s308 = smul.addr %s307, 4
          %s309 = scalar_lea.hbm %s0, %s308
          %s310 = sshll.u32 %s309, 4
          %s311 = int_to_ptr.hbm [resolvable:$true] %s310
          %s312 = sshll.u32 %s303, 4
          %s313 = int_to_ptr.vmem [resolvable:$true] %s312
          %318 = dma.hbm_to_vmem [thread:$0]  %s311, 2432, %s313, %s300, 128, 128, 8
        $region52: #{tpu_custom_call.1} parent=47 // pred_fallthru
          _
      $region48: #{tpu_custom_call.1} parent=5 // pred_fallthru
        _
      %p319 = scmp.le.s32.totalorder 1, %s22
      %p320 = scmp.lt.s32.totalorder %s22, 3
      %p321 = pnand %p319, %p320
      %p322 = pneg %p321
      // Predicated region
      $region53: #{tpu_custom_call.1} parent=5 // pred_check
        _
      $region54: #{tpu_custom_call.1} parent=5 // pred_check_branch
        %324 = sbr.rel (%p321) target = $region56
      $region55: #{tpu_custom_call.1} parent=5 // pred_region
        %s325 = ssub.s32 %s22, 1
        %s326 = sand.u32 %s35, 1
        %s327 = scalar_lea.sflag [#allocation3], %s326
        %s328 = sand.u32 %s35, 1
        %s329 = smul.addr %s328, 152
        %s330 = scalar_lea.vmem [#allocation2], %s329
        // Predicated region
        $region57: #{tpu_custom_call.1} parent=55 // pred_check
          %p331 = pneg %p48
        $region58: #{tpu_custom_call.1} parent=55 // pred_check_branch
          %333 = sbr.rel (%p331) target = $region60
        $region59: #{tpu_custom_call.1} parent=55 // pred_region
          %335 = dma.done %s327, 2432
        $region60: #{tpu_custom_call.1} parent=55 // pred_fallthru
          _
        // Predicated region
        $region61: #{tpu_custom_call.1} parent=55 // pred_check
          %p336 = pneg %p69
        $region62: #{tpu_custom_call.1} parent=55 // pred_check_branch
          %338 = sbr.rel (%p336) target = $region64
        $region63: #{tpu_custom_call.1} parent=55 // pred_region
          %340 = dma.done [#allocation6], 2048
        $region64: #{tpu_custom_call.1} parent=55 // pred_fallthru
          _
        %s341 = sand.u32 %s35, 1
        %s342 = scalar_lea.sflag [#allocation3], %s341
        %s343 = sand.u32 %s35, 1
        %s344 = smul.addr %s343, 152
        %s345 = scalar_lea.vmem [#allocation2], %s344
        %p346 = pneg %p48
        %p347 = pneg %p45
        %p348 = pneg %p69
        %p349 = pneg %p66
        %p350 = pneg %p90
        %p351 = pneg %p87
        %p352 = pneg %p111
        %p353 = pneg %p108
        %p354 = pneg %p132
        %p355 = pneg %p129
        %p356 = pneg %p153
        %p357 = pneg %p150
        %p358 = pneg %p174
        %p359 = pneg %p171
        %p360 = pneg %p195
        %p361 = pneg %p192
        %p362 = pneg %p216
        %p363 = pneg %p213
        %p364 = pneg %p242
        %p365 = pneg %p239
        %s366 = sand.u32 %s229, 1
        %s367 = scalar_lea.sflag [#allocation4], %s366
        %s368 = sand.u32 %s229, 1
        %s369 = smul.addr %s368, 152
        %s370 = scalar_lea.vmem [#allocation7], %s369
        %s371 = smul.u32 19, %s27
        %s372 = smul.u32 19, %s27
        %v374 = vld [vmem:[%s330] sm:$0xff]
        %v375 = vld [vmem:[%s330 + $0x8] sm:$0xff]
        %v376 = vld [vmem:[%s330 + $0x10] sm:$0xff]
        %v377 = vld [vmem:[%s330 + $0x18] sm:$0xff]
        %v378 = vld [vmem:[%s330 + $0x20] sm:$0xff]
        %v379 = vld [vmem:[%s330 + $0x28] sm:$0xff]
        %v380 = vld [vmem:[%s330 + $0x30] sm:$0xff]
        %v381 = vld [vmem:[%s330 + $0x38] sm:$0xff]
        %v382 = vld [vmem:[%s330 + $0x40] sm:$0xff]
        %v383 = vld [vmem:[%s330 + $0x48] sm:$0xff]
        %v384 = vld [vmem:[%s330 + $0x50] sm:$0xff]
        %v385 = vld [vmem:[%s330 + $0x58] sm:$0xff]
        %v386 = vld [vmem:[%s330 + $0x60] sm:$0xff]
        %v387 = vld [vmem:[%s330 + $0x68] sm:$0xff]
        %v388 = vld [vmem:[%s330 + $0x70] sm:$0xff]
        %v389 = vld [vmem:[%s330 + $0x78] sm:$0xff]
        %v390 = vld [vmem:[%s330 + $0x80] sm:$0xff]
        %v391 = vld [vmem:[%s330 + $0x88] sm:$0xff]
        %v392 = vld [vmem:[%s330 + $0x90] sm:$0xff]
        %v393 = vld [vmem:[#allocation5] sm:$0xf]
        %v394 = vld [vmem:[#allocation5 + $0x4] sm:$0xf]
        %v395 = vld [vmem:[#allocation5 + $0x8] sm:$0xf]
        %v396 = vld [vmem:[#allocation5 + $0xc] sm:$0xf]
        %v397 = vld [vmem:[#allocation5 + $0x10] sm:$0xf]
        %v398 = vld [vmem:[#allocation5 + $0x14] sm:$0xf]
        %v399 = vld [vmem:[#allocation5 + $0x18] sm:$0xf]
        %v400 = vld [vmem:[#allocation5 + $0x1c] sm:$0xf]
        %v401 = vld [vmem:[#allocation5 + $0x20] sm:$0xf]
        %v402 = vld [vmem:[#allocation5 + $0x24] sm:$0xf]
        %v403 = vld [vmem:[#allocation5 + $0x28] sm:$0xf]
        %v404 = vld [vmem:[#allocation5 + $0x2c] sm:$0xf]
        %v405 = vld [vmem:[#allocation5 + $0x30] sm:$0xf]
        %v406 = vld [vmem:[#allocation5 + $0x34] sm:$0xf]
        %v407 = vld [vmem:[#allocation5 + $0x38] sm:$0xf]
        %v408 = vld [vmem:[#allocation5 + $0x3c] sm:$0xf]
        %v409 = vld [vmem:[#allocation5 + $0x40] sm:$0xf]
        %v410 = vld [vmem:[#allocation5 + $0x44] sm:$0xf]
        %v411 = vld [vmem:[#allocation5 + $0x48] sm:$0xf]
        %v412 = vld [vmem:[#allocation5 + $0x4c] sm:$0xf]
        %v413 = vld [vmem:[#allocation5 + $0x50] sm:$0xf]
        %v414 = vld [vmem:[#allocation5 + $0x54] sm:$0xf]
        %v415 = vld [vmem:[#allocation5 + $0x58] sm:$0xf]
        %v416 = vld [vmem:[#allocation5 + $0x5c] sm:$0xf]
        %v417 = vld [vmem:[#allocation5 + $0x60] sm:$0xf]
        %v418 = vld [vmem:[#allocation5 + $0x64] sm:$0xf]
        %v419 = vld [vmem:[#allocation5 + $0x68] sm:$0xf]
        %v420 = vld [vmem:[#allocation5 + $0x6c] sm:$0xf]
        %v421 = vld [vmem:[#allocation5 + $0x70] sm:$0xf]
        %v422 = vld [vmem:[#allocation5 + $0x74] sm:$0xf]
        %v423 = vld [vmem:[#allocation5 + $0x78] sm:$0xf]
        %v424 = vld [vmem:[#allocation5 + $0x7c] sm:$0xf]
        %v425 = vld [vmem:[%s2] sm:$0x1]
        %v427 = vperm.slane %v425, 0
        %v448 = vunpack.c.l.b16 %v374
        %v449 = vunpack.c.h.b16 %v374
        %v450 = vunpack.c.l.b16 %v375
        %v451 = vunpack.c.h.b16 %v375
        %v452 = vunpack.c.l.b16 %v376
        %v453 = vunpack.c.h.b16 %v376
        %v454 = vunpack.c.l.b16 %v377
        %v455 = vunpack.c.h.b16 %v377
        %v456 = vunpack.c.l.b16 %v378
        %v457 = vunpack.c.h.b16 %v378
        %v458 = vunpack.c.l.b16 %v379
        %v459 = vunpack.c.h.b16 %v379
        %v460 = vunpack.c.l.b16 %v380
        %v461 = vunpack.c.h.b16 %v380
        %v462 = vunpack.c.l.b16 %v381
        %v463 = vunpack.c.h.b16 %v381
        %v464 = vunpack.c.l.b16 %v382
        %v465 = vunpack.c.h.b16 %v382
        %v466 = vunpack.c.l.b16 %v383
        %v467 = vunpack.c.h.b16 %v383
        %v468 = vunpack.c.l.b16 %v384
        %v469 = vunpack.c.h.b16 %v384
        %v470 = vunpack.c.l.b16 %v385
        %v471 = vunpack.c.h.b16 %v385
        %v472 = vunpack.c.l.b16 %v386
        %v473 = vunpack.c.h.b16 %v386
        %v474 = vunpack.c.l.b16 %v387
        %v475 = vunpack.c.h.b16 %v387
        %v476 = vunpack.c.l.b16 %v388
        %v477 = vunpack.c.h.b16 %v388
        %v478 = vunpack.c.l.b16 %v389
        %v479 = vunpack.c.h.b16 %v389
        %v480 = vunpack.c.l.b16 %v390
        %v481 = vunpack.c.h.b16 %v390
        %v482 = vunpack.c.l.b16 %v391
        %v483 = vunpack.c.h.b16 %v391
        %v484 = vunpack.c.l.b16 %v392
        %v485 = vunpack.c.h.b16 %v392
        %v486 = vpack.c.b16 %v450, %v448
        %v487 = vpack.c.b16 %v451, %v449
        %v488 = vpack.c.b16 %v454, %v452
        %v489 = vpack.c.b16 %v455, %v453
        %v490 = vpack.c.b16 %v458, %v456
        %v491 = vpack.c.b16 %v459, %v457
        %v492 = vpack.c.b16 %v462, %v460
        %v493 = vpack.c.b16 %v463, %v461
        %v494 = vpack.c.b16 %v466, %v464
        %v495 = vpack.c.b16 %v467, %v465
        %v496 = vpack.c.b16 %v470, %v468
        %v497 = vpack.c.b16 %v471, %v469
        %v498 = vpack.c.b16 %v474, %v472
        %v499 = vpack.c.b16 %v475, %v473
        %v500 = vpack.c.b16 %v478, %v476
        %v501 = vpack.c.b16 %v479, %v477
        %v502 = vpack.c.b16 %v482, %v480
        %v503 = vpack.c.b16 %v483, %v481
        %v504 = vpack.c.b16 %v484, %v484
        %v505 = vpack.c.b16 %v485, %v485
        %v558 = vunpack.c.l.b16 %v393
        %v559 = vunpack.c.l.b16 %v394
        %v560 = vunpack.c.l.b16 %v395
        %v561 = vunpack.c.l.b16 %v396
        %v562 = vunpack.c.l.b16 %v397
        %v563 = vunpack.c.l.b16 %v398
        %v564 = vunpack.c.l.b16 %v399
        %v565 = vunpack.c.l.b16 %v400
        %v566 = vunpack.c.l.b16 %v401
        %v567 = vunpack.c.l.b16 %v402
        %v568 = vunpack.c.l.b16 %v403
        %v569 = vunpack.c.l.b16 %v404
        %v570 = vunpack.c.l.b16 %v405
        %v571 = vunpack.c.l.b16 %v406
        %v572 = vunpack.c.l.b16 %v407
        %v573 = vunpack.c.l.b16 %v408
        %v574 = vunpack.c.l.b16 %v409
        %v575 = vunpack.c.l.b16 %v410
        %v576 = vunpack.c.l.b16 %v411
        %v577 = vunpack.c.l.b16 %v412
        %v578 = vunpack.c.l.b16 %v413
        %v579 = vunpack.c.l.b16 %v414
        %v580 = vunpack.c.l.b16 %v415
        %v581 = vunpack.c.l.b16 %v416
        %v582 = vunpack.c.l.b16 %v417
        %v583 = vunpack.c.l.b16 %v418
        %v584 = vunpack.c.l.b16 %v419
        %v585 = vunpack.c.l.b16 %v420
        %v586 = vunpack.c.l.b16 %v421
        %v587 = vunpack.c.l.b16 %v422
        %v588 = vunpack.c.l.b16 %v423
        %v589 = vunpack.c.l.b16 %v424
        %v590 = vpack.c.b16 %v559, %v558
        %v591 = vpack.c.b16 %v561, %v560
        %v592 = vpack.c.b16 %v563, %v562
        %v593 = vpack.c.b16 %v565, %v564
        %v594 = vpack.c.b16 %v567, %v566
        %v595 = vpack.c.b16 %v569, %v568
        %v596 = vpack.c.b16 %v571, %v570
        %v597 = vpack.c.b16 %v573, %v572
        %v598 = vpack.c.b16 %v575, %v574
        %v599 = vpack.c.b16 %v577, %v576
        %v600 = vpack.c.b16 %v579, %v578
        %v601 = vpack.c.b16 %v581, %v580
        %v602 = vpack.c.b16 %v583, %v582
        %v603 = vpack.c.b16 %v585, %v584
        %v604 = vpack.c.b16 %v587, %v586
        %v605 = vpack.c.b16 %v589, %v588
        %622 = vmatpush.bf16.msra.mxu0 %v597
        %623 = vmatpush.bf16.msra.mxu0 %v596
        %624 = vmatpush.bf16.msra.mxu0 %v595
        %625 = vmatpush.bf16.msra.mxu0 %v594
        %626 = vmatpush.bf16.msra.mxu0 %v593
        %627 = vmatpush.bf16.msra.mxu0 %v592
        %628 = vmatpush.bf16.msra.mxu0 %v591
        %629 = vmatpush.bf16.msra.mxu0 %v590
        %630 = vmatmul.bf16.gmra.mxu0 %v486
        %v631 = vpop.f32.mrf.mxu0
        %v632 = vadd.f32 %v427, %v631
        %v633 = vpop.f32.mrf.mxu0
        %v634 = vadd.f32 %v427, %v633
        %635 = vmatmul.bf16.gmra.mxu0 %v488
        %v636 = vpop.f32.mrf.mxu0
        %v637 = vadd.f32 %v427, %v636
        %v638 = vpop.f32.mrf.mxu0
        %v639 = vadd.f32 %v427, %v638
        %640 = vmatmul.bf16.gmra.mxu0 %v490
        %v641 = vpop.f32.mrf.mxu0
        %v642 = vadd.f32 %v427, %v641
        %v643 = vpop.f32.mrf.mxu0
        %v644 = vadd.f32 %v427, %v643
        %645 = vmatmul.bf16.gmra.mxu0 %v492
        %v646 = vpop.f32.mrf.mxu0
        %v647 = vadd.f32 %v427, %v646
        %v648 = vpop.f32.mrf.mxu0
        %v649 = vadd.f32 %v427, %v648
        %650 = vmatmul.bf16.gmra.mxu0 %v494
        %v651 = vpop.f32.mrf.mxu0
        %v652 = vadd.f32 %v427, %v651
        %v653 = vpop.f32.mrf.mxu0
        %v654 = vadd.f32 %v427, %v653
        %655 = vmatmul.bf16.gmra.mxu0 %v496
        %v656 = vpop.f32.mrf.mxu0
        %v657 = vadd.f32 %v427, %v656
        %v658 = vpop.f32.mrf.mxu0
        %v659 = vadd.f32 %v427, %v658
        %660 = vmatmul.bf16.gmra.mxu0 %v498
        %v661 = vpop.f32.mrf.mxu0
        %v662 = vadd.f32 %v427, %v661
        %v663 = vpop.f32.mrf.mxu0
        %v664 = vadd.f32 %v427, %v663
        %665 = vmatmul.bf16.gmra.mxu0 %v500
        %v666 = vpop.f32.mrf.mxu0
        %v667 = vadd.f32 %v427, %v666
        %v668 = vpop.f32.mrf.mxu0
        %v669 = vadd.f32 %v427, %v668
        %670 = vmatmul.bf16.gmra.mxu0 %v502
        %v671 = vpop.f32.mrf.mxu0
        %v672 = vadd.f32 %v427, %v671
        %v673 = vpop.f32.mrf.mxu0
        %v674 = vadd.f32 %v427, %v673
        %675 = vmatmul.bf16.gmra.mxu0 %v504
        %v676 = vpop.f32.mrf.mxu0
        %v677 = vadd.f32 %v427, %v676
        %v678 = vpop.f32.mrf.mxu0
        %679 = vdwg.mxu0
        %680 = vmatpush.bf16.msra.mxu0 %v605
        %681 = vmatpush.bf16.msra.mxu0 %v604
        %682 = vmatpush.bf16.msra.mxu0 %v603
        %683 = vmatpush.bf16.msra.mxu0 %v602
        %684 = vmatpush.bf16.msra.mxu0 %v601
        %685 = vmatpush.bf16.msra.mxu0 %v600
        %686 = vmatpush.bf16.msra.mxu0 %v599
        %687 = vmatpush.bf16.msra.mxu0 %v598
        %688 = vmatmul.bf16.gmra.mxu0 %v487
        %v689 = vpop.f32.mrf.mxu0
        %v690 = vadd.f32 %v632, %v689
        %v691 = vpop.f32.mrf.mxu0
        %v692 = vadd.f32 %v634, %v691
        %693 = vmatmul.bf16.gmra.mxu0 %v489
        %v694 = vpop.f32.mrf.mxu0
        %v695 = vadd.f32 %v637, %v694
        %v696 = vpop.f32.mrf.mxu0
        %v697 = vadd.f32 %v639, %v696
        %698 = vmatmul.bf16.gmra.mxu0 %v491
        %v699 = vpop.f32.mrf.mxu0
        %v700 = vadd.f32 %v642, %v699
        %v701 = vpop.f32.mrf.mxu0
        %v702 = vadd.f32 %v644, %v701
        %703 = vmatmul.bf16.gmra.mxu0 %v493
        %v704 = vpop.f32.mrf.mxu0
        %v705 = vadd.f32 %v647, %v704
        %v706 = vpop.f32.mrf.mxu0
        %v707 = vadd.f32 %v649, %v706
        %708 = vmatmul.bf16.gmra.mxu0 %v495
        %v709 = vpop.f32.mrf.mxu0
        %v710 = vadd.f32 %v652, %v709
        %v711 = vpop.f32.mrf.mxu0
        %v712 = vadd.f32 %v654, %v711
        %713 = vmatmul.bf16.gmra.mxu0 %v497
        %v714 = vpop.f32.mrf.mxu0
        %v715 = vadd.f32 %v657, %v714
        %v716 = vpop.f32.mrf.mxu0
        %v717 = vadd.f32 %v659, %v716
        %718 = vmatmul.bf16.gmra.mxu0 %v499
        %v719 = vpop.f32.mrf.mxu0
        %v720 = vadd.f32 %v662, %v719
        %v721 = vpop.f32.mrf.mxu0
        %v722 = vadd.f32 %v664, %v721
        %723 = vmatmul.bf16.gmra.mxu0 %v501
        %v724 = vpop.f32.mrf.mxu0
        %v725 = vadd.f32 %v667, %v724
        %v726 = vpop.f32.mrf.mxu0
        %v727 = vadd.f32 %v669, %v726
        %728 = vmatmul.bf16.gmra.mxu0 %v503
        %v729 = vpop.f32.mrf.mxu0
        %v730 = vadd.f32 %v672, %v729
        %v731 = vpop.f32.mrf.mxu0
        %v732 = vadd.f32 %v674, %v731
        %733 = vmatmul.bf16.gmra.mxu0 %v505
        %v734 = vpop.f32.mrf.mxu0
        %v735 = vadd.f32 %v677, %v734
        %v736 = vpop.f32.mrf.mxu0
        %737 = vdwg.mxu0
        %v738 = vmax.f32 %v690, 0.0
        %v739 = vmax.f32 %v692, 0.0
        %v740 = vmax.f32 %v695, 0.0
        %v741 = vmax.f32 %v697, 0.0
        %v742 = vmax.f32 %v700, 0.0
        %v743 = vmax.f32 %v702, 0.0
        %v744 = vmax.f32 %v705, 0.0
        %v745 = vmax.f32 %v707, 0.0
        %v746 = vmax.f32 %v710, 0.0
        %v747 = vmax.f32 %v712, 0.0
        %v748 = vmax.f32 %v715, 0.0
        %v749 = vmax.f32 %v717, 0.0
        %v750 = vmax.f32 %v720, 0.0
        %v751 = vmax.f32 %v722, 0.0
        %v752 = vmax.f32 %v725, 0.0
        %v753 = vmax.f32 %v727, 0.0
        %v754 = vmax.f32 %v730, 0.0
        %v755 = vmax.f32 %v732, 0.0
        %v756 = vmax.f32 %v735, 0.0
        %v757 = vpack.c.bf16 %v739, %v738
        %v758 = vpack.c.bf16 %v741, %v740
        %v759 = vpack.c.bf16 %v743, %v742
        %v760 = vpack.c.bf16 %v745, %v744
        %v761 = vpack.c.bf16 %v747, %v746
        %v762 = vpack.c.bf16 %v749, %v748
        %v763 = vpack.c.bf16 %v751, %v750
        %v764 = vpack.c.bf16 %v753, %v752
        %v765 = vpack.c.bf16 %v755, %v754
        %v766 = vpack.c.bf16 %v756, %v756
        %v767 = vld [vmem:[%s3] sm:$0xf]
        %v768 = vld [vmem:[%s3 + $0x4] sm:$0xf]
        %v769 = vld [vmem:[%s3 + $0x8] sm:$0xf]
        %v770 = vld [vmem:[%s3 + $0xc] sm:$0xf]
        %v771 = vld [vmem:[%s3 + $0x10] sm:$0xf]
        %v772 = vld [vmem:[%s3 + $0x14] sm:$0xf]
        %v773 = vld [vmem:[%s3 + $0x18] sm:$0xf]
        %v774 = vld [vmem:[%s3 + $0x1c] sm:$0xf]
        %v775 = vld [vmem:[%s3 + $0x20] sm:$0xf]
        %v776 = vld [vmem:[%s3 + $0x24] sm:$0xf]
        %v777 = vld [vmem:[%s3 + $0x28] sm:$0xf]
        %v778 = vld [vmem:[%s3 + $0x2c] sm:$0xf]
        %v779 = vld [vmem:[%s3 + $0x30] sm:$0xf]
        %v780 = vld [vmem:[%s3 + $0x34] sm:$0xf]
        %v781 = vld [vmem:[%s3 + $0x38] sm:$0xf]
        %v782 = vld [vmem:[%s3 + $0x3c] sm:$0xf]
        %v783 = vld [vmem:[%s4] sm:$0x1]
        %v785 = vperm.slane %v783, 0
        %v803 = vunpack.c.l.b16 %v767
        %v804 = vunpack.c.l.b16 %v768
        %v805 = vunpack.c.l.b16 %v769
        %v806 = vunpack.c.l.b16 %v770
        %v807 = vunpack.c.l.b16 %v771
        %v808 = vunpack.c.l.b16 %v772
        %v809 = vunpack.c.l.b16 %v773
        %v810 = vunpack.c.l.b16 %v774
        %v811 = vunpack.c.l.b16 %v775
        %v812 = vunpack.c.l.b16 %v776
        %v813 = vunpack.c.l.b16 %v777
        %v814 = vunpack.c.l.b16 %v778
        %v815 = vunpack.c.l.b16 %v779
        %v816 = vunpack.c.l.b16 %v780
        %v817 = vunpack.c.l.b16 %v781
        %v818 = vunpack.c.l.b16 %v782
        %v819 = vpack.c.b16 %v804, %v803
        %v820 = vpack.c.b16 %v806, %v805
        %v821 = vpack.c.b16 %v808, %v807
        %v822 = vpack.c.b16 %v810, %v809
        %v823 = vpack.c.b16 %v812, %v811
        %v824 = vpack.c.b16 %v814, %v813
        %v825 = vpack.c.b16 %v816, %v815
        %v826 = vpack.c.b16 %v818, %v817
        %835 = vmatpush.bf16.msra.mxu0 %v826
        %836 = vmatpush.bf16.msra.mxu0 %v825
        %837 = vmatpush.bf16.msra.mxu0 %v824
        %838 = vmatpush.bf16.msra.mxu0 %v823
        %839 = vmatpush.bf16.msra.mxu0 %v822
        %840 = vmatpush.bf16.msra.mxu0 %v821
        %841 = vmatpush.bf16.msra.mxu0 %v820
        %842 = vmatpush.bf16.msra.mxu0 %v819
        %843 = vmatmul.bf16.gmra.mxu0 %v757
        %v844 = vpop.f32.mrf.mxu0
        %v845 = vadd.f32 %v785, %v844
        %v846 = vpop.f32.mrf.mxu0
        %v847 = vadd.f32 %v785, %v846
        %848 = vmatmul.bf16.gmra.mxu0 %v758
        %v849 = vpop.f32.mrf.mxu0
        %v850 = vadd.f32 %v785, %v849
        %v851 = vpop.f32.mrf.mxu0
        %v852 = vadd.f32 %v785, %v851
        %853 = vmatmul.bf16.gmra.mxu0 %v759
        %v854 = vpop.f32.mrf.mxu0
        %v855 = vadd.f32 %v785, %v854
        %v856 = vpop.f32.mrf.mxu0
        %v857 = vadd.f32 %v785, %v856
        %858 = vmatmul.bf16.gmra.mxu0 %v760
        %v859 = vpop.f32.mrf.mxu0
        %v860 = vadd.f32 %v785, %v859
        %v861 = vpop.f32.mrf.mxu0
        %v862 = vadd.f32 %v785, %v861
        %863 = vmatmul.bf16.gmra.mxu0 %v761
        %v864 = vpop.f32.mrf.mxu0
        %v865 = vadd.f32 %v785, %v864
        %v866 = vpop.f32.mrf.mxu0
        %v867 = vadd.f32 %v785, %v866
        %868 = vmatmul.bf16.gmra.mxu0 %v762
        %v869 = vpop.f32.mrf.mxu0
        %v870 = vadd.f32 %v785, %v869
        %v871 = vpop.f32.mrf.mxu0
        %v872 = vadd.f32 %v785, %v871
        %873 = vmatmul.bf16.gmra.mxu0 %v763
        %v874 = vpop.f32.mrf.mxu0
        %v875 = vadd.f32 %v785, %v874
        %v876 = vpop.f32.mrf.mxu0
        %v877 = vadd.f32 %v785, %v876
        %878 = vmatmul.bf16.gmra.mxu0 %v764
        %v879 = vpop.f32.mrf.mxu0
        %v880 = vadd.f32 %v785, %v879
        %v881 = vpop.f32.mrf.mxu0
        %v882 = vadd.f32 %v785, %v881
        %883 = vmatmul.bf16.gmra.mxu0 %v765
        %v884 = vpop.f32.mrf.mxu0
        %v885 = vadd.f32 %v785, %v884
        %v886 = vpop.f32.mrf.mxu0
        %v887 = vadd.f32 %v785, %v886
        %888 = vmatmul.bf16.gmra.mxu0 %v766
        %v889 = vpop.f32.mrf.mxu0
        %v890 = vadd.f32 %v785, %v889
        %v891 = vpop.f32.mrf.mxu0
        %892 = vdwg.mxu0
        %v893 = vmax.f32 %v845, 0.0
        %v894 = vmax.f32 %v847, 0.0
        %v895 = vmax.f32 %v850, 0.0
        %v896 = vmax.f32 %v852, 0.0
        %v897 = vmax.f32 %v855, 0.0
        %v898 = vmax.f32 %v857, 0.0
        %v899 = vmax.f32 %v860, 0.0
        %v900 = vmax.f32 %v862, 0.0
        %v901 = vmax.f32 %v865, 0.0
        %v902 = vmax.f32 %v867, 0.0
        %v903 = vmax.f32 %v870, 0.0
        %v904 = vmax.f32 %v872, 0.0
        %v905 = vmax.f32 %v875, 0.0
        %v906 = vmax.f32 %v877, 0.0
        %v907 = vmax.f32 %v880, 0.0
        %v908 = vmax.f32 %v882, 0.0
        %v909 = vmax.f32 %v885, 0.0
        %v910 = vmax.f32 %v887, 0.0
        %v911 = vmax.f32 %v890, 0.0
        %v912 = vpack.c.bf16 %v894, %v893
        %v913 = vpack.c.bf16 %v896, %v895
        %v914 = vpack.c.bf16 %v898, %v897
        %v915 = vpack.c.bf16 %v900, %v899
        %v916 = vpack.c.bf16 %v902, %v901
        %v917 = vpack.c.bf16 %v904, %v903
        %v918 = vpack.c.bf16 %v906, %v905
        %v919 = vpack.c.bf16 %v908, %v907
        %v920 = vpack.c.bf16 %v910, %v909
        %v921 = vpack.c.bf16 %v911, %v911
        %v922 = vld [vmem:[%s5] sm:$0xf]
        %v923 = vld [vmem:[%s5 + $0x4] sm:$0xf]
        %v924 = vld [vmem:[%s5 + $0x8] sm:$0xf]
        %v925 = vld [vmem:[%s5 + $0xc] sm:$0xf]
        %v926 = vld [vmem:[%s5 + $0x10] sm:$0xf]
        %v927 = vld [vmem:[%s5 + $0x14] sm:$0xf]
        %v928 = vld [vmem:[%s5 + $0x18] sm:$0xf]
        %v929 = vld [vmem:[%s5 + $0x1c] sm:$0xf]
        %v930 = vld [vmem:[%s5 + $0x20] sm:$0xf]
        %v931 = vld [vmem:[%s5 + $0x24] sm:$0xf]
        %v932 = vld [vmem:[%s5 + $0x28] sm:$0xf]
        %v933 = vld [vmem:[%s5 + $0x2c] sm:$0xf]
        %v934 = vld [vmem:[%s5 + $0x30] sm:$0xf]
        %v935 = vld [vmem:[%s5 + $0x34] sm:$0xf]
        %v936 = vld [vmem:[%s5 + $0x38] sm:$0xf]
        %v937 = vld [vmem:[%s5 + $0x3c] sm:$0xf]
        %v938 = vld [vmem:[%s6] sm:$0x1]
        %v940 = vperm.slane %v938, 0
        %v958 = vunpack.c.l.b16 %v922
        %v959 = vunpack.c.l.b16 %v923
        %v960 = vunpack.c.l.b16 %v924
        %v961 = vunpack.c.l.b16 %v925
        %v962 = vunpack.c.l.b16 %v926
        %v963 = vunpack.c.l.b16 %v927
        %v964 = vunpack.c.l.b16 %v928
        %v965 = vunpack.c.l.b16 %v929
        %v966 = vunpack.c.l.b16 %v930
        %v967 = vunpack.c.l.b16 %v931
        %v968 = vunpack.c.l.b16 %v932
        %v969 = vunpack.c.l.b16 %v933
        %v970 = vunpack.c.l.b16 %v934
        %v971 = vunpack.c.l.b16 %v935
        %v972 = vunpack.c.l.b16 %v936
        %v973 = vunpack.c.l.b16 %v937
        %v974 = vpack.c.b16 %v959, %v958
        %v975 = vpack.c.b16 %v961, %v960
        %v976 = vpack.c.b16 %v963, %v962
        %v977 = vpack.c.b16 %v965, %v964
        %v978 = vpack.c.b16 %v967, %v966
        %v979 = vpack.c.b16 %v969, %v968
        %v980 = vpack.c.b16 %v971, %v970
        %v981 = vpack.c.b16 %v973, %v972
        %990 = vmatpush.bf16.msra.mxu0 %v981
        %991 = vmatpush.bf16.msra.mxu0 %v980
        %992 = vmatpush.bf16.msra.mxu0 %v979
        %993 = vmatpush.bf16.msra.mxu0 %v978
        %994 = vmatpush.bf16.msra.mxu0 %v977
        %995 = vmatpush.bf16.msra.mxu0 %v976
        %996 = vmatpush.bf16.msra.mxu0 %v975
        %997 = vmatpush.bf16.msra.mxu0 %v974
        %998 = vmatmul.bf16.gmra.mxu0 %v912
        %v999 = vpop.f32.mrf.mxu0
        %v1000 = vadd.f32 %v940, %v999
        %v1001 = vpop.f32.mrf.mxu0
        %v1002 = vadd.f32 %v940, %v1001
        %1003 = vmatmul.bf16.gmra.mxu0 %v913
        %v1004 = vpop.f32.mrf.mxu0
        %v1005 = vadd.f32 %v940, %v1004
        %v1006 = vpop.f32.mrf.mxu0
        %v1007 = vadd.f32 %v940, %v1006
        %1008 = vmatmul.bf16.gmra.mxu0 %v914
        %v1009 = vpop.f32.mrf.mxu0
        %v1010 = vadd.f32 %v940, %v1009
        %v1011 = vpop.f32.mrf.mxu0
        %v1012 = vadd.f32 %v940, %v1011
        %1013 = vmatmul.bf16.gmra.mxu0 %v915
        %v1014 = vpop.f32.mrf.mxu0
        %v1015 = vadd.f32 %v940, %v1014
        %v1016 = vpop.f32.mrf.mxu0
        %v1017 = vadd.f32 %v940, %v1016
        %1018 = vmatmul.bf16.gmra.mxu0 %v916
        %v1019 = vpop.f32.mrf.mxu0
        %v1020 = vadd.f32 %v940, %v1019
        %v1021 = vpop.f32.mrf.mxu0
        %v1022 = vadd.f32 %v940, %v1021
        %1023 = vmatmul.bf16.gmra.mxu0 %v917
        %v1024 = vpop.f32.mrf.mxu0
        %v1025 = vadd.f32 %v940, %v1024
        %v1026 = vpop.f32.mrf.mxu0
        %v1027 = vadd.f32 %v940, %v1026
        %1028 = vmatmul.bf16.gmra.mxu0 %v918
        %v1029 = vpop.f32.mrf.mxu0
        %v1030 = vadd.f32 %v940, %v1029
        %v1031 = vpop.f32.mrf.mxu0
        %v1032 = vadd.f32 %v940, %v1031
        %1033 = vmatmul.bf16.gmra.mxu0 %v919
        %v1034 = vpop.f32.mrf.mxu0
        %v1035 = vadd.f32 %v940, %v1034
        %v1036 = vpop.f32.mrf.mxu0
        %v1037 = vadd.f32 %v940, %v1036
        %1038 = vmatmul.bf16.gmra.mxu0 %v920
        %v1039 = vpop.f32.mrf.mxu0
        %v1040 = vadd.f32 %v940, %v1039
        %v1041 = vpop.f32.mrf.mxu0
        %v1042 = vadd.f32 %v940, %v1041
        %1043 = vmatmul.bf16.gmra.mxu0 %v921
        %v1044 = vpop.f32.mrf.mxu0
        %v1045 = vadd.f32 %v940, %v1044
        %v1046 = vpop.f32.mrf.mxu0
        %1047 = vdwg.mxu0
        %v1048 = vmax.f32 %v1000, 0.0
        %v1049 = vmax.f32 %v1002, 0.0
        %v1050 = vmax.f32 %v1005, 0.0
        %v1051 = vmax.f32 %v1007, 0.0
        %v1052 = vmax.f32 %v1010, 0.0
        %v1053 = vmax.f32 %v1012, 0.0
        %v1054 = vmax.f32 %v1015, 0.0
        %v1055 = vmax.f32 %v1017, 0.0
        %v1056 = vmax.f32 %v1020, 0.0
        %v1057 = vmax.f32 %v1022, 0.0
        %v1058 = vmax.f32 %v1025, 0.0
        %v1059 = vmax.f32 %v1027, 0.0
        %v1060 = vmax.f32 %v1030, 0.0
        %v1061 = vmax.f32 %v1032, 0.0
        %v1062 = vmax.f32 %v1035, 0.0
        %v1063 = vmax.f32 %v1037, 0.0
        %v1064 = vmax.f32 %v1040, 0.0
        %v1065 = vmax.f32 %v1042, 0.0
        %v1066 = vmax.f32 %v1045, 0.0
        %v1067 = vpack.c.bf16 %v1049, %v1048
        %v1068 = vpack.c.bf16 %v1051, %v1050
        %v1069 = vpack.c.bf16 %v1053, %v1052
        %v1070 = vpack.c.bf16 %v1055, %v1054
        %v1071 = vpack.c.bf16 %v1057, %v1056
        %v1072 = vpack.c.bf16 %v1059, %v1058
        %v1073 = vpack.c.bf16 %v1061, %v1060
        %v1074 = vpack.c.bf16 %v1063, %v1062
        %v1075 = vpack.c.bf16 %v1065, %v1064
        %v1076 = vpack.c.bf16 %v1066, %v1066
        %v1077 = vld [vmem:[%s7] sm:$0xf]
        %v1078 = vld [vmem:[%s7 + $0x4] sm:$0xf]
        %v1079 = vld [vmem:[%s7 + $0x8] sm:$0xf]
        %v1080 = vld [vmem:[%s7 + $0xc] sm:$0xf]
        %v1081 = vld [vmem:[%s7 + $0x10] sm:$0xf]
        %v1082 = vld [vmem:[%s7 + $0x14] sm:$0xf]
        %v1083 = vld [vmem:[%s7 + $0x18] sm:$0xf]
        %v1084 = vld [vmem:[%s7 + $0x1c] sm:$0xf]
        %v1085 = vld [vmem:[%s8] sm:$0x1]
        %v1087 = vperm.slane %v1085, 0
        %v1097 = vunpack.c.l.b16 %v1077
        %v1098 = vunpack.c.l.b16 %v1078
        %v1099 = vunpack.c.l.b16 %v1079
        %v1100 = vunpack.c.l.b16 %v1080
        %v1101 = vunpack.c.l.b16 %v1081
        %v1102 = vunpack.c.l.b16 %v1082
        %v1103 = vunpack.c.l.b16 %v1083
        %v1104 = vunpack.c.l.b16 %v1084
        %v1105 = vpack.c.b16 %v1098, %v1097
        %v1106 = vpack.c.b16 %v1100, %v1099
        %v1107 = vpack.c.b16 %v1102, %v1101
        %v1108 = vpack.c.b16 %v1104, %v1103
        %vm1113 = vcmask 523264
        %v1115 = vsel %vm1113, %v1067, 0
        %v1118 = vsel %vm1113, %v1068, 0
        %v1121 = vsel %vm1113, %v1069, 0
        %v1124 = vsel %vm1113, %v1070, 0
        %v1127 = vsel %vm1113, %v1071, 0
        %v1130 = vsel %vm1113, %v1072, 0
        %v1133 = vsel %vm1113, %v1073, 0
        %v1136 = vsel %vm1113, %v1074, 0
        %v1139 = vsel %vm1113, %v1075, 0
        %v1142 = vsel %vm1113, %v1076, 0
        %1144 = vmatpush.bf16.msra.mxu0 0
        %1145 = vmatpush.bf16.msra.mxu0 0
        %1146 = vmatpush.bf16.msra.mxu0 0
        %1147 = vmatpush.bf16.msra.mxu0 0
        %1148 = vmatpush.bf16.msra.mxu0 %v1108
        %1149 = vmatpush.bf16.msra.mxu0 %v1107
        %1150 = vmatpush.bf16.msra.mxu0 %v1106
        %1151 = vmatpush.bf16.msra.mxu0 %v1105
        %1152 = vmatmul.bf16.gmra.mxu0 %v1115
        %v1153 = vpop.f32.mrf.mxu0
        %v1154 = vadd.f32 %v1087, %v1153
        %v1155 = vpop.f32.mrf.mxu0
        %v1156 = vadd.f32 %v1087, %v1155
        %1157 = vmatmul.bf16.gmra.mxu0 %v1118
        %v1158 = vpop.f32.mrf.mxu0
        %v1159 = vadd.f32 %v1087, %v1158
        %v1160 = vpop.f32.mrf.mxu0
        %v1161 = vadd.f32 %v1087, %v1160
        %1162 = vmatmul.bf16.gmra.mxu0 %v1121
        %v1163 = vpop.f32.mrf.mxu0
        %v1164 = vadd.f32 %v1087, %v1163
        %v1165 = vpop.f32.mrf.mxu0
        %v1166 = vadd.f32 %v1087, %v1165
        %1167 = vmatmul.bf16.gmra.mxu0 %v1124
        %v1168 = vpop.f32.mrf.mxu0
        %v1169 = vadd.f32 %v1087, %v1168
        %v1170 = vpop.f32.mrf.mxu0
        %v1171 = vadd.f32 %v1087, %v1170
        %1172 = vmatmul.bf16.gmra.mxu0 %v1127
        %v1173 = vpop.f32.mrf.mxu0
        %v1174 = vadd.f32 %v1087, %v1173
        %v1175 = vpop.f32.mrf.mxu0
        %v1176 = vadd.f32 %v1087, %v1175
        %1177 = vmatmul.bf16.gmra.mxu0 %v1130
        %v1178 = vpop.f32.mrf.mxu0
        %v1179 = vadd.f32 %v1087, %v1178
        %v1180 = vpop.f32.mrf.mxu0
        %v1181 = vadd.f32 %v1087, %v1180
        %1182 = vmatmul.bf16.gmra.mxu0 %v1133
        %v1183 = vpop.f32.mrf.mxu0
        %v1184 = vadd.f32 %v1087, %v1183
        %v1185 = vpop.f32.mrf.mxu0
        %v1186 = vadd.f32 %v1087, %v1185
        %1187 = vmatmul.bf16.gmra.mxu0 %v1136
        %v1188 = vpop.f32.mrf.mxu0
        %v1189 = vadd.f32 %v1087, %v1188
        %v1190 = vpop.f32.mrf.mxu0
        %v1191 = vadd.f32 %v1087, %v1190
        %1192 = vmatmul.bf16.gmra.mxu0 %v1139
        %v1193 = vpop.f32.mrf.mxu0
        %v1194 = vadd.f32 %v1087, %v1193
        %v1195 = vpop.f32.mrf.mxu0
        %v1196 = vadd.f32 %v1087, %v1195
        %1197 = vmatmul.bf16.gmra.mxu0 %v1142
        %v1198 = vpop.f32.mrf.mxu0
        %v1199 = vadd.f32 %v1087, %v1198
        %v1200 = vpop.f32.mrf.mxu0
        %1201 = vdwg.mxu0
        %1202 = vst [vmem:[%s370] sm:$0xff] %v1154
        %1203 = vst [vmem:[%s370 + $0x8] sm:$0xff] %v1156
        %1204 = vst [vmem:[%s370 + $0x10] sm:$0xff] %v1159
        %1205 = vst [vmem:[%s370 + $0x18] sm:$0xff] %v1161
        %1206 = vst [vmem:[%s370 + $0x20] sm:$0xff] %v1164
        %1207 = vst [vmem:[%s370 + $0x28] sm:$0xff] %v1166
        %1208 = vst [vmem:[%s370 + $0x30] sm:$0xff] %v1169
        %1209 = vst [vmem:[%s370 + $0x38] sm:$0xff] %v1171
        %1210 = vst [vmem:[%s370 + $0x40] sm:$0xff] %v1174
        %1211 = vst [vmem:[%s370 + $0x48] sm:$0xff] %v1176
        %1212 = vst [vmem:[%s370 + $0x50] sm:$0xff] %v1179
        %1213 = vst [vmem:[%s370 + $0x58] sm:$0xff] %v1181
        %1214 = vst [vmem:[%s370 + $0x60] sm:$0xff] %v1184
        %1215 = vst [vmem:[%s370 + $0x68] sm:$0xff] %v1186
        %1216 = vst [vmem:[%s370 + $0x70] sm:$0xff] %v1189
        %1217 = vst [vmem:[%s370 + $0x78] sm:$0xff] %v1191
        %1218 = vst [vmem:[%s370 + $0x80] sm:$0xff] %v1194
        %1219 = vst [vmem:[%s370 + $0x88] sm:$0xff] %v1196
        %1220 = vst [vmem:[%s370 + $0x90] sm:$0xff] %v1199
        %s1221 = sand.u32 %s229, 1
        %s1222 = scalar_lea.sflag [#allocation4], %s1221
        %s1223 = sand.u32 %s229, 1
        %s1224 = smul.addr %s1223, 152
        %s1225 = scalar_lea.vmem [#allocation7], %s1224
        // Predicated region
        $region65: #{tpu_custom_call.1} parent=55 // pred_check
          %p1226 = pneg %p239
        $region66: #{tpu_custom_call.1} parent=55 // pred_check_branch
          %1228 = sbr.rel (%p1226) target = $region68
        $region67: #{tpu_custom_call.1} parent=55 // pred_region
          %s1229 = smul.u32 19, %s27
          %1231 = vsyncadd %s1222, 0
          %s1232 = smul.addr %s1229, 8
          %s1233 = scalar_lea.hbm %s9, %s1232
          %s1234 = sshll.u32 %s1225, 4
          %s1235 = int_to_ptr.vmem [resolvable:$true] %s1234
          %s1236 = sshll.u32 %s1233, 4
          %s1237 = int_to_ptr.hbm [resolvable:$true] %s1236
          %1242 = dma.vmem_to_hbm [thread:$0]  %s1235, 2432, %s1237, %s1222, 128, 128, 8
        $region68: #{tpu_custom_call.1} parent=55 // pred_fallthru
          _
      $region56: #{tpu_custom_call.1} parent=5 // pred_fallthru
        _
      %p1243 = scmp.le.s32.totalorder 2, %s22
      // Predicated region
      $region69: #{tpu_custom_call.1} parent=5 // pred_check
        %p1244 = pneg %p1243
      $region70: #{tpu_custom_call.1} parent=5 // pred_check_branch
        %1246 = sbr.rel (%p1244) target = $region72
      $region71: #{tpu_custom_call.1} parent=5 // pred_region
        %s1247 = ssub.s32 %s22, 2
        // Predicated region
        $region73: #{tpu_custom_call.1} parent=71 // pred_check
          %p1248 = pneg %p245
        $region74: #{tpu_custom_call.1} parent=71 // pred_check_branch
          %1250 = sbr.rel (%p1248) target = $region76
        $region75: #{tpu_custom_call.1} parent=71 // pred_region
          %s1251 = sand.u32 %s230, 1
          %s1252 = scalar_lea.sflag [#allocation4], %s1251
          %s1253 = sand.u32 %s230, 1
          %s1254 = smul.addr %s1253, 152
          %s1255 = scalar_lea.vmem [#allocation7], %s1254
          %1257 = dma.done %s1252, 2432
        $region76: #{tpu_custom_call.1} parent=71 // pred_fallthru
          _
      $region72: #{tpu_custom_call.1} parent=5 // pred_fallthru
        _
    $region6: #{tpu_custom_call.1} parent=1 // loop_footer
      %s26 = sadd.s32 1, %s22
    $region7: #{tpu_custom_call.1} parent=1 // loop_footer_branch
      %21 = sbr.rel target = $region3
    $region8: #{tpu_custom_call.1} parent=1 // loop_exit
      _
    %1258 = vsyncpa [#allocation3], 1
    %s1259 = scalar_lea.sflag [#allocation3], 1
    %1260 = vsyncpa %s1259, 1
    %1261 = vsyncpa [#allocation6], 1
    %1262 = vsyncpa [#allocation4], 1
    %s1263 = scalar_lea.sflag [#allocation4], 1
    %1264 = vsyncpa %s1263, 1

</llo_original>
